<compile_context>
chip_gen: v6e
topology: v6e:2x2x1
jax: 0.10.0
libtpu: 0.0.40
codegen_flags: <defaults>
</compile_context>

<pallas_src>
import functools

import jax
import jax.numpy as jnp
from jax.experimental import pallas as pl
from jax.experimental.pallas import tpu as pltpu


# Sublane tile height by dtype itemsize (last-two-dims VMEM padding: (sub, 128)).
_SUBLANE = {1: 32, 2: 16, 4: 8}


def _round_up(x, m):
    return ((x + m - 1) // m) * m


def _padded_ctx_row_bytes(n_ctx, d, dtype):
    """Physical VMEM bytes of one (n_ctx, d) tile after (sublane, 128) padding."""
    it = jnp.dtype(dtype).itemsize
    return _round_up(n_ctx, _SUBLANE.get(it, 8)) * _round_up(d, 128) * it


def _pick_classes_per_block(n_cls, payload_per_class, scratch_per_class, *,
                            target_bytes, vmem_budget):
    """Largest classes-per-step whose HBM payload stays <= target_bytes and
    whose padding-aware VMEM scratch stays <= vmem_budget (no divisibility
    requirement; the kernels clamp the last, partial step)."""
    cpb = n_cls
    cpb = min(cpb, max(1, target_bytes // max(1, payload_per_class)))
    cpb = min(cpb, max(1, vmem_budget // max(1, scratch_per_class)))
    return max(1, int(cpb))


def _generic_ctx_write_kernel(emb_hbm, ctx_ref, out_hbm, src_vmem, out_sem, *,
                              n_ctx, n_cls, n_desc, cpb, nsteps):
    """Shared (n_ctx, D) context written into `cpb` classes' rows per step.

    The scratch is filled once (step 0, it never changes) and up to two output
    DMAs are kept in flight across steps (deferred waits, drained on the final
    step).  Requires 'arbitrary' dimension semantics (sequential grid).
    """
    del emb_hbm  # aliased to out_hbm: prefix/suffix rows are already in place
    i = pl.program_id(0)
    slot = i % 2
    rows = cpb * n_desc
    # Clamp the last (partial) step so it always covers `cpb` whole classes.
    # The overlap re-writes identical bytes -> idempotent.
    row0 = jnp.minimum(i * cpb, n_cls - cpb) * n_desc

    @pl.when(i == 0)
    def _():
        # Broadcast the shared context over this step's rows once; the same
        # scratch content serves every step.  .astype handles an fp32 ctx
        # parameter with fp16/bf16 CLIP token embeddings.
        src_vmem[...] = jnp.broadcast_to(
            ctx_ref[...].astype(src_vmem.dtype)[None], src_vmem.shape)

    def out_copy(s):
        return pltpu.make_async_copy(
            src_vmem,
            out_hbm.at[pl.ds(row0, rows), pl.ds(1, n_ctx), :],
            out_sem.at[s])

    if nsteps >= 3:
        # Free this semaphore slot: wait for the DMA issued two steps ago.
        @pl.when(i >= 2)
        def _():
            out_copy(slot).wait()

    out_copy(slot).start()

    # Drain: on the final step wait for our own DMA and (if it exists) the
    # previous step's still-in-flight DMA on the other slot.
    @pl.when(i == nsteps - 1)
    def _():
        out_copy(slot).wait()
        if nsteps >= 2:
            out_copy(1 - slot).wait()


def _csc_ctx_write_kernel(emb_hbm, ctx_hbm, out_hbm,
                          ctx_vmem, src_a, src_b, ctx_sem, out_sem, *,
                          n_ctx, n_cls, n_desc, cpb, ha, hb, nsteps):
    """Class-specific context: `cpb` classes per step.

    The (cpb, n_ctx, D) ctx block for step i+1 is prefetched (double-buffered)
    while step i's rows are filled/written, and each step's rows are split into
    two halves so the half-B fill overlaps half-A's HBM write.  Output DMAs are
    drained every step.  Requires 'arbitrary' dimension semantics.
    """
    del emb_hbm
    i = pl.program_id(0)
    slot = i % 2

    def c_start(step):
        # Clamp the last partial step onto whole classes (idempotent overlap).
        return jnp.minimum(step * cpb, n_cls - cpb)

    def ctx_copy(step, s):
        return pltpu.make_async_copy(
            ctx_hbm.at[pl.ds(c_start(step), cpb)], ctx_vmem.at[s], ctx_sem.at[s])

    # Prime the ctx pipeline on the first step.
    @pl.when(i == 0)
    def _():
        ctx_copy(0, 0).start()

    # Wait for this step's ctx block, then prefetch the next one.
    ctx_copy(i, slot).wait()
    if nsteps > 1:
        @pl.when(i + 1 < nsteps)
        def _():
            ctx_copy(i + 1, 1 - slot).start()

    row0 = c_start(i) * n_desc
    D = src_a.shape[-1]
    ctx_blk = ctx_vmem[slot]                      # (cpb, n_ctx, D), ctx dtype

    def fill(dst, lo, nc):
        vals = ctx_blk[lo:lo + nc].astype(dst.dtype)          # (nc, n_ctx, D)
        if n_desc == 1:
            dst[...] = vals
            return
        vals = jnp.broadcast_to(vals[:, None], (nc, n_desc, n_ctx, D))
        dst[...] = vals.reshape(nc * n_desc, n_ctx, D)

    # Half A: fill + start its HBM write.
    fill(src_a, 0, ha)
    cp_a = pltpu.make_async_copy(
        src_a, out_hbm.at[pl.ds(row0, ha * n_desc), pl.ds(1, n_ctx), :],
        out_sem.at[0])
    cp_a.start()

    if hb > 0:
        # Half B's fill overlaps half A's DMA.
        fill(src_b, ha, hb)
        cp_b = pltpu.make_async_copy(
            src_b,
            out_hbm.at[pl.ds(row0 + ha * n_desc, hb * n_desc), pl.ds(1, n_ctx), :],
            out_sem.at[1])
        cp_b.start()

    cp_a.wait()
    if hb > 0:
        cp_b.wait()


def prompt_learner_forward(embedding, ctx, *, n_ctx, n_desc_per_cls,
                           class_token_position="end",
                           target_block_bytes=4 << 20):
    """Builds 'end'-position prompts by overwriting the ctx rows of the token
    embedding in place.

    embedding : (B, L, D)  stacked token embeddings, B = n_cls * n_desc_per_cls
                (aliased to the output -- DONATE it, or XLA copies it first)
    ctx       : (n_ctx, D) generic  OR  (n_cls, n_ctx, D) class-specific
    returns   : (B, L, D)  prompts = concat([prefix, ctx, suffix], axis=1)
    """
    if class_token_position != "end":
        # TODO(synk): 'middle'/'front' need per-descriptor name_lens slicing.
        raise NotImplementedError(
            "Only class_token_position == 'end' is implemented in the kernel")

    B, L, D = embedding.shape
    assert n_desc_per_cls >= 1 and B % n_desc_per_cls == 0, (B, n_desc_per_cls)
    n_cls = B // n_desc_per_cls
    assert 1 <= n_ctx and 1 + n_ctx <= L, (n_ctx, L)
    csc = ctx.ndim == 3
    assert ctx.shape[-2:] == (n_ctx, D), ctx.shape
    if csc:
        assert ctx.shape[0] == n_cls, (ctx.shape, n_cls)

    out_it = jnp.dtype(embedding.dtype).itemsize
    ctx_it = jnp.dtype(ctx.dtype).itemsize

    # HBM payload / padding-aware VMEM scratch per class, used to size steps.
    payload_per_class = n_desc_per_cls * n_ctx * D * out_it
    scratch_per_class = n_desc_per_cls * _padded_ctx_row_bytes(n_ctx, D, embedding.dtype)
    if csc:
        scratch_per_class += 2 * _padded_ctx_row_bytes(n_ctx, D, ctx.dtype)

    cpb = _pick_classes_per_block(
        n_cls, payload_per_class, scratch_per_class,
        target_bytes=target_block_bytes, vmem_budget=20 << 20)
    nsteps = -(-n_cls // cpb)
    rows_per_step = cpb * n_desc_per_cls

    if csc:
        ha = (cpb + 1) // 2
        hb = cpb - ha
        kernel = functools.partial(
            _csc_ctx_write_kernel, n_ctx=n_ctx, n_cls=n_cls,
            n_desc=n_desc_per_cls, cpb=cpb, ha=ha, hb=hb, nsteps=nsteps)
        in_specs = [pl.BlockSpec(memory_space=pl.ANY),   # embedding (aliased)
                    pl.BlockSpec(memory_space=pl.ANY)]   # ctx (manual prefetch)
        scratch_shapes = [
            pltpu.VMEM((2, cpb, n_ctx, D), ctx.dtype),                     # ctx x2
            pltpu.VMEM((ha * n_desc_per_cls, n_ctx, D), embedding.dtype),  # half A
            pltpu.VMEM((max(hb, 1) * n_desc_per_cls, n_ctx, D), embedding.dtype),
            pltpu.SemaphoreType.DMA((2,)),   # ctx prefetch semaphores
            pltpu.SemaphoreType.DMA((2,)),   # output write semaphores
        ]
    else:
        kernel = functools.partial(
            _generic_ctx_write_kernel, n_ctx=n_ctx, n_cls=n_cls,
            n_desc=n_desc_per_cls, cpb=cpb, nsteps=nsteps)
        in_specs = [pl.BlockSpec(memory_space=pl.ANY),            # embedding
                    # Constant block index; tiny even if refetched per step.
                    pl.BlockSpec((n_ctx, D), lambda i: (0, 0))]
        scratch_shapes = [
            pltpu.VMEM((rows_per_step, n_ctx, D), embedding.dtype),
            pltpu.SemaphoreType.DMA((2,)),
        ]

    # Padding-aware VMEM limit (scratch + small margin for Pallas's internal /
    # double-buffered ctx block); capped at 32 MiB for v7x's 64 MiB VMEM.
    scratch_bytes = cpb * scratch_per_class
    if csc and hb == 0:
        scratch_bytes += n_desc_per_cls * _padded_ctx_row_bytes(n_ctx, D, embedding.dtype)
    vmem_limit = int(min(32 << 20, max(8 << 20, scratch_bytes + (4 << 20))))

    out_bytes = B * n_ctx * D * out_it
    ctx_bytes = (nsteps * cpb * n_ctx * D * ctx_it) if csc else (n_ctx * D * ctx_it)
    cost = pl.CostEstimate(flops=0, transcendentals=0,
                           bytes_accessed=int(out_bytes + ctx_bytes))

    return pl.pallas_call(
        kernel,
        out_shape=jax.ShapeDtypeStruct((B, L, D), embedding.dtype),
        grid_spec=pltpu.PrefetchScalarGridSpec(
            num_scalar_prefetch=0,
            grid=(nsteps,),
            in_specs=in_specs,
            out_specs=pl.BlockSpec(memory_space=pl.ANY),
            scratch_shapes=scratch_shapes,
        ),
        input_output_aliases={0: 0},  # output buffer IS the token embedding
        compiler_params=pltpu.CompilerParams(
            # 'arbitrary': cross-step DMA pipelining / fill-once / ctx prefetch
            # assume a sequential grid on one core; every started DMA is drained
            # before exit.  The kernel is HBM-write bound (shared per chip), so
            # a megacore split would not add bandwidth on v7x.
            dimension_semantics=("arbitrary",),
            vmem_limit_bytes=vmem_limit,
        ),
        cost_estimate=cost,
    )(embedding, ctx)


if __name__ == "__main__":
    # ----- synthetic, deterministic setup (no checkpoint / tokenizer) -----
    key = jax.random.PRNGKey(0)
    n_cls = 3            # number of classes (keys of gpt_descriptions)
    n_desc = 2           # descriptors per class (all equal here)
    n_ctx = 4            # cfg.TRAINER.VIP.N_CTX
    ctx_dim = 128        # clip_model.ln_final.weight.shape[0] (small synthetic)
    seq_len = 16         # tokenized prompt length (CLIP uses 77; small here)
    dtype = jnp.float32
    B = n_cls * n_desc

    k_ctx, k_csc, k_emb = jax.random.split(key, 3)

    # nn.init.normal_(ctx_vectors, std=0.02)
    ctx_generic = (0.02 * jax.random.normal(k_ctx, (n_ctx, ctx_dim))).astype(dtype)
    ctx_csc = (0.02 * jax.random.normal(k_csc, (n_cls, n_ctx, ctx_dim))).astype(dtype)

    # synthetic clip_model.token_embedding(tokenized_prompts), rows stacked
    embedding = jax.random.normal(k_emb, (B, seq_len, ctx_dim), dtype)

    # references built BEFORE calling (the embedding copies get donated)
    prefix = embedding[:, :1, :]                  # self.token_prefix (SOS)
    suffix = embedding[:, 1 + n_ctx:, :]          # self.token_suffix (CLS, EOS)
    ref_generic = jnp.concatenate(
        [prefix, jnp.broadcast_to(ctx_generic[None], (B, n_ctx, ctx_dim)), suffix],
        axis=1)
    ref_csc = jnp.concatenate(
        [prefix, jnp.repeat(ctx_csc, n_desc, axis=0), suffix], axis=1)

    def run(ctx, target_bytes):
        fwd = functools.partial(prompt_learner_forward, n_ctx=n_ctx,
                                n_desc_per_cls=n_desc,
                                class_token_position="end",
                                target_block_bytes=target_bytes)
        # Donate the embedding so the in-kernel aliasing is a true in-place op.
        fn = jax.jit(fwd, donate_argnums=0)
        return jax.block_until_ready(fn(jnp.copy(embedding), ctx))

    # Default blocking (single big step here) and a forced multi-step,
    # non-divisor configuration (2 classes/step over 3 classes -> the last
    # step is clamped and overlaps; exercises the deferred-wait / prefetch
    # pipelines and the clamp path).
    small_target = 2 * n_desc * n_ctx * ctx_dim * jnp.dtype(dtype).itemsize
    for tgt in (4 << 20, small_target):
        out_g = run(ctx_generic, tgt)
        out_c = run(ctx_csc, tgt)
        assert out_g.shape == (B, seq_len, ctx_dim) and out_g.dtype == dtype
        assert jnp.array_equal(out_g, ref_generic), f"generic mismatch (target={tgt})"
        assert jnp.array_equal(out_c, ref_csc), f"csc mismatch (target={tgt})"

    # Mixed precision: fp32 ctx parameter with bf16 token embeddings (the CLIP
    # half-precision configuration); the kernel casts ctx on the fill.
    emb16 = embedding.astype(jnp.bfloat16)
    ref16 = jnp.concatenate(
        [emb16[:, :1, :],
         jnp.broadcast_to(ctx_generic.astype(jnp.bfloat16)[None], (B, n_ctx, ctx_dim)),
         emb16[:, 1 + n_ctx:, :]], axis=1)
    fwd16 = jax.jit(
        functools.partial(prompt_learner_forward, n_ctx=n_ctx,
                          n_desc_per_cls=n_desc, class_token_position="end"),
        donate_argnums=0)
    out16 = jax.block_until_ready(fwd16(jnp.copy(emb16), ctx_generic))
    assert out16.dtype == jnp.bfloat16
    assert jnp.array_equal(out16, ref16), "bf16 generic mismatch"

    # Re-split into the per-class OrderedDict the PyTorch module returns.
    out_g = run(ctx_generic, 4 << 20)
    class_names = [f"class_{i}" for i in range(n_cls)]
    prompts = {k: out_g[i * n_desc:(i + 1) * n_desc]
               for i, k in enumerate(class_names)}
    for k in class_names:
        assert prompts[k].shape == (n_desc, seq_len, ctx_dim)

    print("KERNEL_OK")
</pallas_src>

<mosaic_0001>
module attributes {stable_mosaic.version = 11 : i64} {
  func.func @_generic_ctx_write_kernel(%arg0: i32, %arg1: memref<6x16x128xf32, #tpu.memory_space<any>>, %arg2: memref<4x128xf32, #tpu.memory_space<vmem>>, %arg3: memref<6x16x128xf32, #tpu.memory_space<any>>, %arg4: memref<6x4x128xf32, #tpu.memory_space<vmem>>, %arg5: memref<2x!tpu.dma_semaphore, #tpu.memory_space<semaphore_mem>>) attributes {dimension_semantics = [#tpu.dimension_semantics<arbitrary>], iteration_bounds = array<i64: 1>, scalar_prefetch = 0 : i64, scratch_operands = 2 : i64, tpu.core_type = #tpu.core_type<tc>, window_params = [{}, {pipeline_mode = #tpu.pipeline_mode<synchronous>, transform_indices = @transform_1, window_bounds = array<i64: 4, 128>}, {}]} {
    %c2_i32 = arith.constant 2 : i32
    %c0_i32 = arith.constant 0 : i32
    %0 = arith.cmpi eq, %c2_i32, %c0_i32 : i32
    %c1_i32 = arith.constant 1 : i32
    %1 = arith.select %0, %c1_i32, %c2_i32 : i32
    %2 = arith.remsi %arg0, %1 : i32
    %c0_i32_0 = arith.constant 0 : i32
    %3 = arith.cmpi ne, %2, %c0_i32_0 : i32
    %c0_i32_1 = arith.constant 0 : i32
    %4 = arith.cmpi slt, %2, %c0_i32_1 : i32
    %c0_i32_2 = arith.constant 0 : i32
    %5 = arith.cmpi slt, %1, %c0_i32_2 : i32
    %6 = arith.xori %4, %5 : i1
    %7 = arith.andi %6, %3 : i1
    %8 = arith.addi %2, %1 : i32
    %9 = arith.select %7, %8, %2 : i32
    %c3_i32 = arith.constant 3 : i32
    %10 = arith.muli %arg0, %c3_i32 : i32
    %c0_i32_3 = arith.constant 0 : i32
    %11 = arith.minsi %10, %c0_i32_3 : i32
    %c2_i32_4 = arith.constant 2 : i32
    %12 = arith.muli %11, %c2_i32_4 : i32
    %c0_i32_5 = arith.constant 0 : i32
    %13 = arith.cmpi eq, %arg0, %c0_i32_5 : i32
    %14 = arith.extui %13 : i1 to i32
    %c0_i32_6 = arith.constant 0 : i32
    %15 = arith.cmpi ne, %14, %c0_i32_6 : i32
    scf.if %15 {
      %c0 = arith.constant 0 : index
      %c0_11 = arith.constant 0 : index
      %22 = vector.load %arg2[%c0, %c0_11] : memref<4x128xf32, #tpu.memory_space<vmem>>, vector<4x128xf32>
      %23 = vector.shape_cast %22 : vector<4x128xf32> to vector<1x4x128xf32>
      %24 = vector.shape_cast %23 : vector<1x4x128xf32> to vector<1x4x128xf32>
      %25 = vector.broadcast %24 : vector<1x4x128xf32> to vector<6x4x128xf32>
      %c0_12 = arith.constant 0 : index
      %c0_13 = arith.constant 0 : index
      %c0_14 = arith.constant 0 : index
      %26 = vector.load %arg4[%c0_12, %c0_13, %c0_14] : memref<6x4x128xf32, #tpu.memory_space<vmem>>, vector<6x4x128xf32>
      tpu.vector_store %arg4[%c0_12, %c0_13, %c0_14], %25 {strides = array<i32>} : memref<6x4x128xf32, #tpu.memory_space<vmem>>, vector<6x4x128xf32>,
    } else {
    }
    %c1_i32_7 = arith.constant 1 : i32
    %c0_i32_8 = arith.constant 0 : i32
    %16 = tpu.memref_slice %arg3[%12, %c1_i32_7, %c0_i32_8] : memref<6x16x128xf32, #tpu.memory_space<any>> -> memref<6x4x128xf32, #tpu.memory_space<any>>
    %17 = tpu.memref_slice %arg5[%9] : memref<2x!tpu.dma_semaphore, #tpu.memory_space<semaphore_mem>> -> memref<1x!tpu.dma_semaphore, #tpu.memory_space<semaphore_mem>>
    %18 = tpu.memref_squeeze %17 : memref<1x!tpu.dma_semaphore, #tpu.memory_space<semaphore_mem>> -> memref<!tpu.dma_semaphore, #tpu.memory_space<semaphore_mem>>
    tpu.enqueue_dma source(%arg4 : memref<6x4x128xf32, #tpu.memory_space<vmem>>) target(%16 : memref<6x4x128xf32, #tpu.memory_space<any>>) target_semaphore(%18 : memref<!tpu.dma_semaphore, #tpu.memory_space<semaphore_mem>>)
    %c0_i32_9 = arith.constant 0 : i32
    %19 = arith.cmpi eq, %arg0, %c0_i32_9 : i32
    %20 = arith.extui %19 : i1 to i32
    %c0_i32_10 = arith.constant 0 : i32
    %21 = arith.cmpi ne, %20, %c0_i32_10 : i32
    scf.if %21 {
      %c1_i32_11 = arith.constant 1 : i32
      %c0_i32_12 = arith.constant 0 : i32
      %22 = tpu.memref_slice %arg3[%12, %c1_i32_11, %c0_i32_12] : memref<6x16x128xf32, #tpu.memory_space<any>> -> memref<6x4x128xf32, #tpu.memory_space<any>>
      %23 = tpu.memref_slice %arg5[%9] : memref<2x!tpu.dma_semaphore, #tpu.memory_space<semaphore_mem>> -> memref<1x!tpu.dma_semaphore, #tpu.memory_space<semaphore_mem>>
      %24 = tpu.memref_squeeze %23 : memref<1x!tpu.dma_semaphore, #tpu.memory_space<semaphore_mem>> -> memref<!tpu.dma_semaphore, #tpu.memory_space<semaphore_mem>>
      tpu.wait_dma2 semaphore(%24 : memref<!tpu.dma_semaphore, #tpu.memory_space<semaphore_mem>>) src(%arg4 : memref<6x4x128xf32, #tpu.memory_space<vmem>>) dst(%22 : memref<6x4x128xf32, #tpu.memory_space<any>>)
    } else {
    }
    return
  }
  func.func @transform_1(%arg0: i32) -> (i32, i32) {
    %c0_i32 = arith.constant 0 : i32
    %c0_i32_0 = arith.constant 0 : i32
    %c0_i32_1 = arith.constant 0 : i32
    return %c0_i32, %c0_i32_0 : i32, i32
  }
}

</mosaic_0001>

<llo_original>
// kernel: prompt_learner_forward.1
$region0: #{prompt_learner_forward.1}
  #allocation0 [shape = 'u32[]', space=smem, size = 0x4, offset = 0x4, fixed_abs, tag = 'smem constant byte address 0x4 - core index']
  #allocation1 [shape = 'u32[144,128]{1,0:T(1,128)}', space=vmem, size = 0x12000, scoped, tag = 'internal scratch']
  #allocation2 [shape = 'f32[6,4,128]{2,1,0:T(4,128)}', space=vmem, size = 0x3000, scoped, tag = 'scratch operand']
  #allocation3 [shape = 's32[2]{0}', space=sflag, size = 0x8, scoped, tag = 'scratch operand']
  #allocation6 [shape = 's32[]', space=sflag, size = 0x4, offset = 0, fixed_abs, tag = 'sflag constant byte address 0x0 - dummy sync flag']
  %s0 = inlined_call_operand.hbm [shape: f32[6,16,128], index: 0, kind: input, shape index: {}, may-alias: {0,2}]
  %s1 = inlined_call_operand.hbm [shape: f32[4,128], index: 1, kind: input, shape index: {}]
  %s2 = inlined_call_operand.hbm [shape: f32[6,16,128], index: 2, kind: output, shape index: {}, may-alias: {0,2}]
  %s3 = sld [smem:[#allocation0]]
  $region18: #{prompt_learner_forward.1} parent=0
    _
  %s5 = ssub.s32 1, %s3
  %s6 = scalar_select 0, %s5, %s3
  $region1: #{prompt_learner_forward.1} parent=0
    #allocation4 [shape = 'u8[2048]{0}', space=vmem, size = 0x800, scoped, tag = 'input window, operand 1, single buffered']
    #allocation5 [shape = 's32[1]{0}', space=sflag, size = 0x4, scoped, tag = 'scoped memory for prompt_learner_forward.1']
    %7 = vsyncpa [#allocation5], 0
    // Predicated region
    $region2: #{prompt_learner_forward.1} parent=1 // pred_check
      _
    $region3: #{prompt_learner_forward.1} parent=1 // pred_check_branch
      %9 = sbr.rel (0) target = $region5
    $region4: #{prompt_learner_forward.1} parent=1 // pred_region
      %s11 = ssub.s32 64, 64
      %12 = vsyncadd [#allocation5], %s11
      %s14 = sshll.u32 [#allocation4], 4
      %s15 = int_to_ptr.vmem [resolvable:$true] %s14
      %17 = dma.hbm_to_vmem [thread:$0]  %s1, 64, %s15, [#allocation5]
    $region5: #{prompt_learner_forward.1} parent=1 // pred_fallthru
      _
    // Predicated region
    $region6: #{prompt_learner_forward.1} parent=1 // pred_check
      _
    $region7: #{prompt_learner_forward.1} parent=1 // pred_check_branch
      %19 = sbr.rel (0) target = $region9
    $region8: #{prompt_learner_forward.1} parent=1 // pred_region
      %20 = dma.done [#allocation5], 64
    $region9: #{prompt_learner_forward.1} parent=1 // pred_fallthru
      _
    %s21 = ssub.s32 0, 0
    %s22 = ssub.s32 0, 0
    %p23 = scmp.ne.s32.totalorder 0, 0
    %p24 = scmp.lt.s32.totalorder 0, 0
    %p25 = pnand %p24, %p23
    %p26 = pneg %p25
    %s27 = sadd.s32 0, 2
    %s28 = scalar_select %p26, %s27, 0
    %s29 = smul.u32 0, 3
    %p30 = scmp.lt.s32.totalorder %s29, 0
    %s31 = scalar_select %p30, %s29, 0
    %s32 = smul.u32 %s31, 2
    %p33 = scmp.eq.s32.totalorder 0, 0
    // Predicated region
    $region10: #{prompt_learner_forward.1} parent=1 // pred_check
      %p34 = pneg %p33
    $region11: #{prompt_learner_forward.1} parent=1 // pred_check_branch
      %36 = sbr.rel (%p34) target = $region13
    $region12: #{prompt_learner_forward.1} parent=1 // pred_region
      %v37 = vld [vmem:[#allocation4] sm:$0xf]
      %38 = vst [vmem:[#allocation2] sm:$0xf] %v37
      %39 = vst [vmem:[#allocation2 + $0x4] sm:$0xf] %v37
      %40 = vst [vmem:[#allocation2 + $0x8] sm:$0xf] %v37
      %41 = vst [vmem:[#allocation2 + $0xc] sm:$0xf] %v37
      %42 = vst [vmem:[#allocation2 + $0x10] sm:$0xf] %v37
      %43 = vst [vmem:[#allocation2 + $0x14] sm:$0xf] %v37
    $region13: #{prompt_learner_forward.1} parent=1 // pred_fallthru
      _
    %s44 = smul.u32 %s32, 16
    %s45 = sadd.s32 1, %s44
    %s46 = smul.addr %s45, 16
    %s47 = scalar_lea.hbm %s2, %s46
    %s48 = scalar_lea.sflag [#allocation3], %s28
    %s50 = sshll.u32 [#allocation2], 4
    %s51 = int_to_ptr.vmem [resolvable:$true] %s50
    %53 = dma.vmem_to_hbm [thread:$0]  %s51, 384, %s47, %s48, 64, 256, 4
    // Predicated region
    $region14: #{prompt_learner_forward.1} parent=1 // pred_check
      %p54 = pneg %p33
    $region15: #{prompt_learner_forward.1} parent=1 // pred_check_branch
      %56 = sbr.rel (%p54) target = $region17
    $region16: #{prompt_learner_forward.1} parent=1 // pred_region
      %s57 = smul.u32 6, 4
      %s58 = smul.u32 %s57, 1
      %s59 = sshll.u32 %s58, 4
      %60 = dma.done %s48, %s59
    $region17: #{prompt_learner_forward.1} parent=1 // pred_fallthru
      _
    %61 = vsyncpa [#allocation5], 1
  %62 = vsyncmov [#allocation3]
  %s63 = vpop.sfrf %62
  %p64 = scmp.eq.s32.totalorder %s63, 0
  %p65 = pneg %p64
  %67 = shalt.err (%p65)
  %s68 = scalar_lea.sflag [#allocation3], 1
  %69 = vsyncmov %s68
  %s70 = vpop.sfrf %69
  %p71 = scmp.eq.s32.totalorder %s70, 0
  %p72 = pneg %p71
  %74 = shalt.err (%p72)

</llo_original>
